<compile_context>
chip_gen: v5e
topology: v5e:2x2
jax: 0.10.0
libtpu: 0.0.40
codegen_flags: <defaults>
</compile_context>

<pallas_src>
import jax
import jax.numpy as jnp
from jax import lax
from jax.experimental import pallas as pl
from jax.experimental.pallas import tpu as pltpu


# --------------------------------------------------------------------------------------
# Stage 1: Q/K/V projections (1x1 convs == channel matmuls), computed exactly once.
# --------------------------------------------------------------------------------------
def _qkv_proj_kernel(x_ref,                       # VMEM (1, C, tp)  f32
                     wq_ref, bq_ref,              # VMEM (Cq, C) bf16, (Cq, 1) f32
                     wk_ref, bk_ref,              # VMEM (Cq, C) bf16, (Cq, 1) f32
                     wv_ref, bv_ref,              # VMEM (C, C)  bf16, (C, 1)  f32
                     q_ref,                       # VMEM (1, Cq, tp) bf16
                     kT_ref,                      # VMEM (1, tp, Cq) bf16  (pre-transposed)
                     v_ref):                      # VMEM (1, C, tp)  bf16
    nn = (((1,), (0,)), ((), ()))                 # canonical (M,K)@(K,N)
    x_b = x_ref[0].astype(jnp.bfloat16)           # (C, tp)

    q = lax.dot_general(wq_ref[...], x_b, nn,
                        preferred_element_type=jnp.float32) + bq_ref[...]   # (Cq, tp)
    k = lax.dot_general(wk_ref[...], x_b, nn,
                        preferred_element_type=jnp.float32) + bk_ref[...]   # (Cq, tp)
    v = lax.dot_general(wv_ref[...], x_b, nn,
                        preferred_element_type=jnp.float32) + bv_ref[...]   # (C, tp)

    q_ref[0] = q.astype(jnp.bfloat16)
    # Transpose K once here (tiny (Cq, tp) f32 tile) so the flash hot loop never
    # touches the XLU for it.
    kT_ref[0] = k.T.astype(jnp.bfloat16)
    v_ref[0] = v.astype(jnp.bfloat16)


# --------------------------------------------------------------------------------------
# Stage 2: flash-style attention with online softmax over the kv axis.
# --------------------------------------------------------------------------------------
def _flash_attn_kernel(gamma_ref,                 # SMEM (1,)
                       x_ref,                     # VMEM (1, C, tq)  f32 (residual only)
                       q_ref,                     # VMEM (1, Cq, tq) bf16
                       kT_ref,                    # VMEM (1, tk, Cq) bf16
                       v_ref,                     # VMEM (1, C, tk)  bf16
                       o_ref,                     # VMEM (1, C, tq)  f32
                       m_ref, l_ref, acc_ref):    # VMEM (1, tq), (1, tq), (C, tq) f32
    ki = pl.program_id(2)
    nk = pl.num_programs(2)

    @pl.when(ki == 0)
    def _():
        m_ref[...] = jnp.full_like(m_ref, -jnp.inf)
        l_ref[...] = jnp.zeros_like(l_ref)
        acc_ref[...] = jnp.zeros_like(acc_ref)

    nn = (((1,), (0,)), ((), ()))                 # canonical (M,K)@(K,N)

    # Energy, transposed: e_t[j, i] = <k[:, j], q[:, i]>  -> (tk, tq).  Both operands
    # already in the right layout; pure NN MXU matmul, f32 accumulation.
    e_t = lax.dot_general(kT_ref[0], q_ref[0], nn,
                          preferred_element_type=jnp.float32)               # (tk, tq)

    # Online softmax over j (axis 0); stats are lane-dense (1, tq) f32.
    m_prev = m_ref[...]
    m_new = jnp.maximum(m_prev, jnp.max(e_t, axis=0, keepdims=True))        # (1, tq)
    alpha = jnp.exp(m_prev - m_new)                                         # (1, tq)
    p = jnp.exp(e_t - m_new)                                                # (tk, tq)
    l_ref[...] = alpha * l_ref[...] + jnp.sum(p, axis=0, keepdims=True)

    # acc[c, i] += sum_j v[c, j] * p[j, i]
    pv = lax.dot_general(v_ref[0], p.astype(jnp.bfloat16), nn,
                         preferred_element_type=jnp.float32)                # (C, tq)
    acc_ref[...] = alpha * acc_ref[...] + pv
    m_ref[...] = m_new

    @pl.when(ki == nk - 1)
    def _():
        out = acc_ref[...] * pl.reciprocal(l_ref[...], approx=True)         # (C, tq) f32
        # Residual x tile only read here (keeps its f32 live range out of the hot loop).
        o_ref[0] = gamma_ref[0] * out + x_ref[0]


def _tile_size(hw, cap):
    """Largest tile <= cap that divides hw (multiple of 128 when hw > cap)."""
    if hw <= cap:
        return hw
    t = (cap // 128) * 128
    while t >= 128:
        if hw % t == 0:
            return t
        t -= 128
    # TODO(synk): when HW has no multiple-of-128 divisor <= cap, fall back to a
    # monolithic tile; a padded tiled path would be needed for very large awkward HW.
    return hw


def attention_module(x_nchw, params, *, tq=None, tk=None):
    """x_nchw: [B, C, H, W] float32.  Returns [B, C, H, W] float32."""
    B, C, H, W = x_nchw.shape
    HW = H * W
    Cq = params["wq"].shape[0]

    # Asymmetric tiles: tk > tq amortizes accumulator rescales and deepens the PV
    # contraction; tq capped at 512 for v7x's 64 MiB VMEM (q/k/v are bf16 so tk=1024 fits).
    tq = _tile_size(HW, 512) if tq is None else tq
    tk = _tile_size(HW, 1024) if tk is None else tk
    tp = _tile_size(HW, 512)
    assert HW % tq == 0 and HW % tk == 0 and HW % tp == 0
    nq, nk = HW // tq, HW // tk

    # NCHW -> [B, C, HW]: free reshape, no transpose / HBM round-trip.
    x_cf = x_nchw.reshape(B, C, HW).astype(jnp.float32)

    # bf16 weights once in the wrapper (halves their VMEM residency; no in-kernel casts).
    wq_b = params["wq"].astype(jnp.bfloat16)
    wk_b = params["wk"].astype(jnp.bfloat16)
    wv_b = params["wv"].astype(jnp.bfloat16)

    cparams = pltpu.CompilerParams(
        dimension_semantics=("parallel", "parallel"),
        vmem_limit_bytes=64 << 20)

    # ---------------- Stage 1: project Q, K (transposed), V once ----------------
    q, kT, v = pl.pallas_call(
        _qkv_proj_kernel,
        out_shape=(jax.ShapeDtypeStruct((B, Cq, HW), jnp.bfloat16),
                   jax.ShapeDtypeStruct((B, HW, Cq), jnp.bfloat16),
                   jax.ShapeDtypeStruct((B, C, HW), jnp.bfloat16)),
        grid=(B, HW // tp),
        in_specs=[
            pl.BlockSpec((1, C, tp), lambda b, i: (b, 0, i)),      # x
            pl.BlockSpec((Cq, C), lambda b, i: (0, 0)),            # wq (bf16)
            pl.BlockSpec((Cq, 1), lambda b, i: (0, 0)),            # bq
            pl.BlockSpec((Cq, C), lambda b, i: (0, 0)),            # wk (bf16)
            pl.BlockSpec((Cq, 1), lambda b, i: (0, 0)),            # bk
            pl.BlockSpec((C, C), lambda b, i: (0, 0)),             # wv (bf16)
            pl.BlockSpec((C, 1), lambda b, i: (0, 0)),             # bv
        ],
        out_specs=(pl.BlockSpec((1, Cq, tp), lambda b, i: (b, 0, i)),
                   pl.BlockSpec((1, tp, Cq), lambda b, i: (b, i, 0)),
                   pl.BlockSpec((1, C, tp), lambda b, i: (b, 0, i))),
        compiler_params=cparams,
    )(x_cf, wq_b, params["bq"], wk_b, params["bk"], wv_b, params["bv"])

    # ---------------- Stage 2: flash attention + gamma residual ----------------
    out_cf = pl.pallas_call(
        _flash_attn_kernel,
        out_shape=jax.ShapeDtypeStruct((B, C, HW), jnp.float32),
        grid=(B, nq, nk),
        in_specs=[
            pl.BlockSpec(memory_space=pltpu.MemorySpace.SMEM),              # gamma
            pl.BlockSpec((1, C, tq), lambda b, qi, ki: (b, 0, qi)),         # x residual
            pl.BlockSpec((1, Cq, tq), lambda b, qi, ki: (b, 0, qi)),        # q tile
            pl.BlockSpec((1, tk, Cq), lambda b, qi, ki: (b, ki, 0)),        # k^T tile
            pl.BlockSpec((1, C, tk), lambda b, qi, ki: (b, 0, ki)),         # v tile
        ],
        out_specs=pl.BlockSpec((1, C, tq), lambda b, qi, ki: (b, 0, qi)),
        scratch_shapes=[
            pltpu.VMEM((1, tq), jnp.float32),   # running max
            pltpu.VMEM((1, tq), jnp.float32),   # running sum
            pltpu.VMEM((C, tq), jnp.float32),   # output accumulator
        ],
        compiler_params=pltpu.CompilerParams(
            dimension_semantics=("parallel", "parallel", "arbitrary"),
            vmem_limit_bytes=64 << 20),
    )(params["gamma"], x_cf, q, kT, v)

    return out_cf.reshape(B, C, H, W)


def init_params(key, in_channels):
    """Deterministic parameter init matching AttentionModule.__init__ (conv weights as
    (out_ch, in_ch), biases as (out_ch, 1))."""
    cq = in_channels // 8
    k = jax.random.split(key, 6)
    scale = 0.1
    return {
        "wq": scale * jax.random.normal(k[0], (cq, in_channels), jnp.float32),
        "bq": scale * jax.random.normal(k[1], (cq, 1), jnp.float32),
        "wk": scale * jax.random.normal(k[2], (cq, in_channels), jnp.float32),
        "bk": scale * jax.random.normal(k[3], (cq, 1), jnp.float32),
        "wv": scale * jax.random.normal(k[4], (in_channels, in_channels), jnp.float32),
        "bv": scale * jax.random.normal(k[5], (in_channels, 1), jnp.float32),
        # PyTorch inits gamma to 0 (output == x); use 0.5 so the attention path is
        # actually exercised by the numerical check below.
        "gamma": jnp.array([0.5], dtype=jnp.float32),
    }


def _reference(x_nchw, params):
    """Pure-JAX f32 reference mirroring the PyTorch forward exactly."""
    B, C, H, W = x_nchw.shape
    HW = H * W
    x_cf = x_nchw.reshape(B, C, HW)
    q = jnp.einsum("oc,bcn->bon", params["wq"], x_cf) + params["bq"][None]   # (B,Cq,HW)
    k = jnp.einsum("oc,bcn->bon", params["wk"], x_cf) + params["bk"][None]   # (B,Cq,HW)
    v = jnp.einsum("oc,bcn->bon", params["wv"], x_cf) + params["bv"][None]   # (B,C,HW)
    energy = jnp.einsum("bci,bcj->bij", q, k)                                # (B,HW,HW)
    attn = jax.nn.softmax(energy, axis=-1)
    out = jnp.einsum("bcj,bij->bci", v, attn).reshape(B, C, H, W)
    return params["gamma"][0] * out + x_nchw


if __name__ == "__main__":
    # in_channels=16 -> query/key channels = 16 // 8 = 2; spatial 16x16 -> HW = 256.
    B, C, H, W = 2, 16, 16, 16
    key = jax.random.PRNGKey(0)
    kx, kp = jax.random.split(key)
    x = jax.random.normal(kx, (B, C, H, W), jnp.float32)
    params = init_params(kp, C)
    y_ref = _reference(x, params)

    # Single-kv-tile path (whole HW in one block).
    y_full = jax.block_until_ready(attention_module(x, params))
    # Multi-tile flash path (exercises the online-softmax accumulation across kv steps).
    y_tiled = jax.block_until_ready(attention_module(x, params, tq=128, tk=128))

    assert y_full.shape == (B, C, H, W) and y_tiled.shape == (B, C, H, W)
    # bf16 q/k/v storage + bf16 MXU operands (f32 accumulation) vs f32 reference.
    assert jnp.allclose(y_full, y_ref, atol=1e-2, rtol=1e-2), "full-tile mismatch vs reference"
    assert jnp.allclose(y_tiled, y_ref, atol=1e-2, rtol=1e-2), "tiled mismatch vs reference"

    print("KERNEL_OK")
</pallas_src>

<mosaic_0001>
module attributes {stable_mosaic.version = 11 : i64} {
  func.func @_qkv_proj_kernel(%arg0: i32, %arg1: i32, %arg2: memref<1x16x256xf32, #tpu.memory_space<vmem>>, %arg3: memref<2x16xbf16, #tpu.memory_space<vmem>>, %arg4: memref<2x1xf32, #tpu.memory_space<vmem>>, %arg5: memref<2x16xbf16, #tpu.memory_space<vmem>>, %arg6: memref<2x1xf32, #tpu.memory_space<vmem>>, %arg7: memref<16x16xbf16, #tpu.memory_space<vmem>>, %arg8: memref<16x1xf32, #tpu.memory_space<vmem>>, %arg9: memref<1x2x256xbf16, #tpu.memory_space<vmem>>, %arg10: memref<1x256x2xbf16, #tpu.memory_space<vmem>>, %arg11: memref<1x16x256xbf16, #tpu.memory_space<vmem>>) attributes {dimension_semantics = [#tpu.dimension_semantics<parallel>, #tpu.dimension_semantics<parallel>], iteration_bounds = array<i64: 2, 1>, scalar_prefetch = 0 : i64, scratch_operands = 0 : i64, tpu.core_type = #tpu.core_type<tc>, window_params = [{transform_indices = @transform_0, window_bounds = array<i64: 1, 16, 256>}, {pipeline_mode = #tpu.pipeline_mode<synchronous>, transform_indices = @transform_1, window_bounds = array<i64: 2, 16>}, {pipeline_mode = #tpu.pipeline_mode<synchronous>, transform_indices = @transform_2, window_bounds = array<i64: 2, 1>}, {pipeline_mode = #tpu.pipeline_mode<synchronous>, transform_indices = @transform_3, window_bounds = array<i64: 2, 16>}, {pipeline_mode = #tpu.pipeline_mode<synchronous>, transform_indices = @transform_4, window_bounds = array<i64: 2, 1>}, {pipeline_mode = #tpu.pipeline_mode<synchronous>, transform_indices = @transform_5, window_bounds = array<i64: 16, 16>}, {pipeline_mode = #tpu.pipeline_mode<synchronous>, transform_indices = @transform_6, window_bounds = array<i64: 16, 1>}, {transform_indices = @transform_7, window_bounds = array<i64: 1, 2, 256>}, {transform_indices = @transform_8, window_bounds = array<i64: 1, 256, 2>}, {transform_indices = @transform_9, window_bounds = array<i64: 1, 16, 256>}]} {
    %c0 = arith.constant 0 : index
    %c0_0 = arith.constant 0 : index
    %c0_1 = arith.constant 0 : index
    %0 = vector.load %arg2[%c0, %c0_0, %c0_1] : memref<1x16x256xf32, #tpu.memory_space<vmem>>, vector<1x16x256xf32>
    %1 = vector.shape_cast %0 : vector<1x16x256xf32> to vector<16x256xf32>
    %2 = arith.truncf %1 : vector<16x256xf32> to vector<16x256xbf16>
    %c0_2 = arith.constant 0 : index
    %c0_3 = arith.constant 0 : index
    %3 = vector.load %arg3[%c0_2, %c0_3] : memref<2x16xbf16, #tpu.memory_space<vmem>>, vector<2x16xbf16>
    %cst = arith.constant dense<0.000000e+00> : vector<2x256xf32>
    %4 = tpu.matmul %3, %2, %cst {dimension_numbers = #tpu.dot_dimension_numbers<[1], [0], [0], [1], [0, 0, 1, 1], [], []>} : vector<2x16xbf16>, vector<16x256xbf16>, vector<2x256xf32> -> vector<2x256xf32>
    %c0_4 = arith.constant 0 : index
    %c0_5 = arith.constant 0 : index
    %5 = vector.load %arg4[%c0_4, %c0_5] : memref<2x1xf32, #tpu.memory_space<vmem>>, vector<2x1xf32>
    %6 = vector.broadcast %5 : vector<2x1xf32> to vector<2x256xf32>
    %7 = arith.addf %4, %6 : vector<2x256xf32>
    %c0_6 = arith.constant 0 : index
    %c0_7 = arith.constant 0 : index
    %8 = vector.load %arg5[%c0_6, %c0_7] : memref<2x16xbf16, #tpu.memory_space<vmem>>, vector<2x16xbf16>
    %cst_8 = arith.constant dense<0.000000e+00> : vector<2x256xf32>
    %9 = tpu.matmul %8, %2, %cst_8 {dimension_numbers = #tpu.dot_dimension_numbers<[1], [0], [0], [1], [0, 0, 1, 1], [], []>} : vector<2x16xbf16>, vector<16x256xbf16>, vector<2x256xf32> -> vector<2x256xf32>
    %c0_9 = arith.constant 0 : index
    %c0_10 = arith.constant 0 : index
    %10 = vector.load %arg6[%c0_9, %c0_10] : memref<2x1xf32, #tpu.memory_space<vmem>>, vector<2x1xf32>
    %11 = vector.broadcast %10 : vector<2x1xf32> to vector<2x256xf32>
    %12 = arith.addf %9, %11 : vector<2x256xf32>
    %c0_11 = arith.constant 0 : index
    %c0_12 = arith.constant 0 : index
    %13 = vector.load %arg7[%c0_11, %c0_12] : memref<16x16xbf16, #tpu.memory_space<vmem>>, vector<16x16xbf16>
    %cst_13 = arith.constant dense<0.000000e+00> : vector<16x256xf32>
    %14 = tpu.matmul %13, %2, %cst_13 {dimension_numbers = #tpu.dot_dimension_numbers<[1], [0], [0], [1], [0, 0, 1, 1], [], []>} : vector<16x16xbf16>, vector<16x256xbf16>, vector<16x256xf32> -> vector<16x256xf32>
    %c0_14 = arith.constant 0 : index
    %c0_15 = arith.constant 0 : index
    %15 = vector.load %arg8[%c0_14, %c0_15] : memref<16x1xf32, #tpu.memory_space<vmem>>, vector<16x1xf32>
    %16 = vector.broadcast %15 : vector<16x1xf32> to vector<16x256xf32>
    %17 = arith.addf %14, %16 : vector<16x256xf32>
    %18 = arith.truncf %7 : vector<2x256xf32> to vector<2x256xbf16>
    %c0_16 = arith.constant 0 : index
    %c0_17 = arith.constant 0 : index
    %c0_18 = arith.constant 0 : index
    %19 = vector.load %arg9[%c0_16, %c0_17, %c0_18] : memref<1x2x256xbf16, #tpu.memory_space<vmem>>, vector<1x2x256xbf16>
    %20 = vector.shape_cast %19 : vector<1x2x256xbf16> to vector<2x256xbf16>
    %21 = vector.shape_cast %18 : vector<2x256xbf16> to vector<1x2x256xbf16>
    tpu.vector_store %arg9[%c0_16, %c0_17, %c0_18], %21 {strides = array<i32>} : memref<1x2x256xbf16, #tpu.memory_space<vmem>>, vector<1x2x256xbf16>,
    %22 = tpu.transpose %12, [1, 0] : vector<2x256xf32> -> vector<256x2xf32>
    %23 = arith.truncf %22 : vector<256x2xf32> to vector<256x2xbf16>
    %c0_19 = arith.constant 0 : index
    %c0_20 = arith.constant 0 : index
    %c0_21 = arith.constant 0 : index
    %24 = vector.load %arg10[%c0_19, %c0_20, %c0_21] : memref<1x256x2xbf16, #tpu.memory_space<vmem>>, vector<1x256x2xbf16>
    %25 = vector.shape_cast %24 : vector<1x256x2xbf16> to vector<256x2xbf16>
    %26 = vector.shape_cast %23 : vector<256x2xbf16> to vector<1x256x2xbf16>
    tpu.vector_store %arg10[%c0_19, %c0_20, %c0_21], %26 {strides = array<i32>} : memref<1x256x2xbf16, #tpu.memory_space<vmem>>, vector<1x256x2xbf16>,
    %27 = arith.truncf %17 : vector<16x256xf32> to vector<16x256xbf16>
    %c0_22 = arith.constant 0 : index
    %c0_23 = arith.constant 0 : index
    %c0_24 = arith.constant 0 : index
    %28 = vector.load %arg11[%c0_22, %c0_23, %c0_24] : memref<1x16x256xbf16, #tpu.memory_space<vmem>>, vector<1x16x256xbf16>
    %29 = vector.shape_cast %28 : vector<1x16x256xbf16> to vector<16x256xbf16>
    %30 = vector.shape_cast %27 : vector<16x256xbf16> to vector<1x16x256xbf16>
    tpu.vector_store %arg11[%c0_22, %c0_23, %c0_24], %30 {strides = array<i32>} : memref<1x16x256xbf16, #tpu.memory_space<vmem>>, vector<1x16x256xbf16>,
    return
  }
  func.func @transform_0(%arg0: i32, %arg1: i32) -> (i32, i32, i32) {
    %c0_i32 = arith.constant 0 : i32
    %c0_i32_0 = arith.constant 0 : i32
    return %arg0, %c0_i32, %arg1 : i32, i32, i32
  }
  func.func @transform_1(%arg0: i32, %arg1: i32) -> (i32, i32) {
    %c0_i32 = arith.constant 0 : i32
    %c0_i32_0 = arith.constant 0 : i32
    %c0_i32_1 = arith.constant 0 : i32
    return %c0_i32, %c0_i32_0 : i32, i32
  }
  func.func @transform_2(%arg0: i32, %arg1: i32) -> (i32, i32) {
    %c0_i32 = arith.constant 0 : i32
    %c0_i32_0 = arith.constant 0 : i32
    %c0_i32_1 = arith.constant 0 : i32
    return %c0_i32, %c0_i32_0 : i32, i32
  }
  func.func @transform_3(%arg0: i32, %arg1: i32) -> (i32, i32) {
    %c0_i32 = arith.constant 0 : i32
    %c0_i32_0 = arith.constant 0 : i32
    %c0_i32_1 = arith.constant 0 : i32
    return %c0_i32, %c0_i32_0 : i32, i32
  }
  func.func @transform_4(%arg0: i32, %arg1: i32) -> (i32, i32) {
    %c0_i32 = arith.constant 0 : i32
    %c0_i32_0 = arith.constant 0 : i32
    %c0_i32_1 = arith.constant 0 : i32
    return %c0_i32, %c0_i32_0 : i32, i32
  }
  func.func @transform_5(%arg0: i32, %arg1: i32) -> (i32, i32) {
    %c0_i32 = arith.constant 0 : i32
    %c0_i32_0 = arith.constant 0 : i32
    %c0_i32_1 = arith.constant 0 : i32
    return %c0_i32, %c0_i32_0 : i32, i32
  }
  func.func @transform_6(%arg0: i32, %arg1: i32) -> (i32, i32) {
    %c0_i32 = arith.constant 0 : i32
    %c0_i32_0 = arith.constant 0 : i32
    %c0_i32_1 = arith.constant 0 : i32
    return %c0_i32, %c0_i32_0 : i32, i32
  }
  func.func @transform_7(%arg0: i32, %arg1: i32) -> (i32, i32, i32) {
    %c0_i32 = arith.constant 0 : i32
    %c0_i32_0 = arith.constant 0 : i32
    return %arg0, %c0_i32, %arg1 : i32, i32, i32
  }
  func.func @transform_8(%arg0: i32, %arg1: i32) -> (i32, i32, i32) {
    %c0_i32 = arith.constant 0 : i32
    %c0_i32_0 = arith.constant 0 : i32
    return %arg0, %arg1, %c0_i32 : i32, i32, i32
  }
  func.func @transform_9(%arg0: i32, %arg1: i32) -> (i32, i32, i32) {
    %c0_i32 = arith.constant 0 : i32
    %c0_i32_0 = arith.constant 0 : i32
    return %arg0, %c0_i32, %arg1 : i32, i32, i32
  }
}

</mosaic_0001>

<llo_original>
// kernel: tpu_custom_call.1
$region0: #{tpu_custom_call.1}
  #allocation0 [shape = 'u32[]', space=smem, size = 0x4, offset = 0x4, fixed_abs, tag = 'smem constant byte address 0x4 - core index']
  #allocation1 [shape = 'u32[72,128]{1,0:T(1,128)}', space=vmem, size = 0x9000, scoped, tag = 'internal scratch']
  %s0 = inlined_call_operand.hbm [shape: f32[2,16,256], index: 0, kind: input, shape index: {}]
  %s1 = inlined_call_operand.vmem [shape: bf16[2,16], index: 1, kind: input, shape index: {}]
  %s2 = inlined_call_operand.vmem [shape: f32[2,1], index: 2, kind: input, shape index: {}]
  %s3 = inlined_call_operand.vmem [shape: bf16[2,16], index: 3, kind: input, shape index: {}]
  %s4 = inlined_call_operand.vmem [shape: f32[2,1], index: 4, kind: input, shape index: {}]
  %s5 = inlined_call_operand.vmem [shape: bf16[16,16], index: 5, kind: input, shape index: {}]
  %s6 = inlined_call_operand.vmem [shape: f32[16,1], index: 6, kind: input, shape index: {}]
  %s7 = inlined_call_operand.hbm [shape: bf16[2,2,256], index: 7, kind: output, shape index: {0}]
  %s8 = inlined_call_operand.vmem [shape: bf16[2,256,2], index: 8, kind: output, shape index: {1}]
  %s9 = inlined_call_operand.hbm [shape: bf16[2,16,256], index: 9, kind: output, shape index: {2}]
  %10 = xla_tuple %s7, %s8, %s9
  %s11 = sld [smem:[#allocation0]]
  $region81: #{tpu_custom_call.1} parent=0
    _
  %s13 = ssub.s32 1, %s11
  %s14 = scalar_select 0, %s13, %s11
  $region1: #{tpu_custom_call.1} parent=0
    #allocation2 [shape = 'u8[32768]{0}', space=vmem, size = 0x8000, scoped, tag = 'input window, operand 0']
    #allocation3 [shape = 's32[2]{0}', space=sflag, size = 0x8, scoped, tag = 'scoped memory for tpu_custom_call.1']
    #allocation4 [shape = 's32[2]{0}', space=sflag, size = 0x8, scoped, tag = 'scoped memory for tpu_custom_call.1']
    #allocation5 [shape = 'u8[2048]{0}', space=vmem, size = 0x800, scoped, tag = 'output window, operand 0']
    #allocation6 [shape = 'u8[16384]{0}', space=vmem, size = 0x4000, scoped, tag = 'output window, operand 2']
    #allocation7 [shape = 's32[2]{0}', space=sflag, size = 0x8, scoped, tag = 'scoped memory for tpu_custom_call.1']
    %15 = vsyncpa [#allocation3], 0
    %s16 = scalar_lea.sflag [#allocation3], 1
    %17 = vsyncpa %s16, 0
    %18 = vsyncpa [#allocation4], 0
    %s19 = scalar_lea.sflag [#allocation4], 1
    %20 = vsyncpa %s19, 0
    %21 = vsyncpa [#allocation7], 0
    %s22 = scalar_lea.sflag [#allocation7], 1
    %23 = vsyncpa %s22, 0
    loop: start=0, step=1, limit=4
    $region2: #{tpu_custom_call.1} parent=1 // loop_pre_header
      _
    $region3: #{tpu_custom_call.1} parent=1 // loop_header
      %s25 = sphi 0, %s29
      %p26 = scmp.ge.s32.totalorder %s25, 4
      %s32 = sphi 0, %s44
      %s33 = sphi 0, %s40
      %s34 = sphi 0, %s32
      %s35 = sphi 0, %s33
      %s36 = sphi 0, %s34
      %s37 = sphi 0, %s35
      %s49 = sphi 0, %s51
      %s52 = sphi 0, %s49
      %s53 = sphi 0, %s52
      %s69 = sphi 0, %s53
      %s73 = sphi 0, %s73
      %s75 = sphi 0, %s73
      %s76 = sphi 0, %s75
      %s90 = sphi 0, %s76
      %s94 = sphi 0, %s94
      %s96 = sphi 0, %s94
      %s97 = sphi 0, %s96
      %s111 = sphi 0, %s97
      %s115 = sphi 0, %s115
      %s117 = sphi 0, %s115
      %s118 = sphi 0, %s117
      %s132 = sphi 0, %s118
      %s136 = sphi 0, %s136
      %s138 = sphi 0, %s136
      %s139 = sphi 0, %s138
      %s153 = sphi 0, %s139
      %s157 = sphi 0, %s157
      %s159 = sphi 0, %s157
      %s160 = sphi 0, %s159
      %s174 = sphi 0, %s160
      %s178 = sphi 0, %s178
      %s180 = sphi 0, %s178
      %s181 = sphi 0, %s180
      %s195 = sphi 0, %s181
      %s203 = sphi 0, %s205
      %s206 = sphi 0, %s203
      %s207 = sphi 0, %s206
      %s223 = sphi 0, %s207
      %s231 = sphi 0, %s233
      %s234 = sphi 0, %s231
      %s235 = sphi 0, %s234
      %s251 = sphi 0, %s235
      %s259 = sphi 0, %s261
      %s262 = sphi 0, %s259
      %s263 = sphi 0, %s262
      %s279 = sphi 0, %s263
    $region4: #{tpu_custom_call.1} parent=1 // loop_header_branch
      %28 = sbr.rel (%p26) target = $region8
    $region5: #{tpu_custom_call.1} parent=1 // loop_body
      %s30 = ssub.s32 %s25, 1
      %s31 = ssub.s32 %s25, 2
      %s38 = sadd.s32 1, %s33
      %p39 = scmp.ge.s32.totalorder %s38, 1
      %s40 = scalar_select %p39, 0, %s38
      %s41 = sadd.s32 1, %s32
      %s42 = scalar_select %p39, %s41, %s32
      %p43 = scmp.ge.s32.totalorder %s42, 2
      %s44 = scalar_select %p43, 0, %s42
      %s45 = ssub.s32 %s32, %s44
      %s46 = ssub.s32 %s33, %s40
      %s47 = sor.u32 %s45, %s46
      %p48 = scmp.eq.s32.totalorder %s47, 0
      %s50 = sadd.s32 %s49, 1
      %s51 = scalar_select %p48, %s49, %s50
      %p54 = pneg %p48
      %p55 = scmp.eq.s32.totalorder %s25, 1
      %p56 = por %p54, %p55
      %p57 = scmp.ne.s32.totalorder %s49, %s52
      %p58 = scmp.eq.s32.totalorder %s25, 0
      %p59 = por %p57, %p58
      %p60 = scmp.ne.s32.totalorder %s49, %s52
      %p61 = scmp.eq.s32.totalorder %s30, 1
      %p62 = por %p60, %p61
      %p63 = scmp.ne.s32.totalorder %s52, %s53
      %p64 = scmp.eq.s32.totalorder %s30, 0
      %p65 = por %p63, %p64
      %p66 = scmp.ne.s32.totalorder %s52, %s53
      %p67 = scmp.eq.s32.totalorder %s31, 1
      %p68 = por %p66, %p67
      %p70 = scmp.ne.s32.totalorder %s53, %s69
      %p71 = scmp.eq.s32.totalorder %s31, 0
      %p72 = por %p70, %p71
      %s74 = sadd.s32 %s73, 1
      %p77 = scmp.eq.s32.totalorder %s25, 1
      %p78 = scmp.ne.s32.totalorder %s73, %s75
      %p79 = scmp.eq.s32.totalorder %s25, 0
      %p80 = por %p78, %p79
      %p81 = scmp.ne.s32.totalorder %s73, %s75
      %p82 = scmp.eq.s32.totalorder %s30, 1
      %p83 = por %p81, %p82
      %p84 = scmp.ne.s32.totalorder %s75, %s76
      %p85 = scmp.eq.s32.totalorder %s30, 0
      %p86 = por %p84, %p85
      %p87 = scmp.ne.s32.totalorder %s75, %s76
      %p88 = scmp.eq.s32.totalorder %s31, 1
      %p89 = por %p87, %p88
      %p91 = scmp.ne.s32.totalorder %s76, %s90
      %p92 = scmp.eq.s32.totalorder %s31, 0
      %p93 = por %p91, %p92
      %s95 = sadd.s32 %s94, 1
      %p98 = scmp.eq.s32.totalorder %s25, 1
      %p99 = scmp.ne.s32.totalorder %s94, %s96
      %p100 = scmp.eq.s32.totalorder %s25, 0
      %p101 = por %p99, %p100
      %p102 = scmp.ne.s32.totalorder %s94, %s96
      %p103 = scmp.eq.s32.totalorder %s30, 1
      %p104 = por %p102, %p103
      %p105 = scmp.ne.s32.totalorder %s96, %s97
      %p106 = scmp.eq.s32.totalorder %s30, 0
      %p107 = por %p105, %p106
      %p108 = scmp.ne.s32.totalorder %s96, %s97
      %p109 = scmp.eq.s32.totalorder %s31, 1
      %p110 = por %p108, %p109
      %p112 = scmp.ne.s32.totalorder %s97, %s111
      %p113 = scmp.eq.s32.totalorder %s31, 0
      %p114 = por %p112, %p113
      %s116 = sadd.s32 %s115, 1
      %p119 = scmp.eq.s32.totalorder %s25, 1
      %p120 = scmp.ne.s32.totalorder %s115, %s117
      %p121 = scmp.eq.s32.totalorder %s25, 0
      %p122 = por %p120, %p121
      %p123 = scmp.ne.s32.totalorder %s115, %s117
      %p124 = scmp.eq.s32.totalorder %s30, 1
      %p125 = por %p123, %p124
      %p126 = scmp.ne.s32.totalorder %s117, %s118
      %p127 = scmp.eq.s32.totalorder %s30, 0
      %p128 = por %p126, %p127
      %p129 = scmp.ne.s32.totalorder %s117, %s118
      %p130 = scmp.eq.s32.totalorder %s31, 1
      %p131 = por %p129, %p130
      %p133 = scmp.ne.s32.totalorder %s118, %s132
      %p134 = scmp.eq.s32.totalorder %s31, 0
      %p135 = por %p133, %p134
      %s137 = sadd.s32 %s136, 1
      %p140 = scmp.eq.s32.totalorder %s25, 1
      %p141 = scmp.ne.s32.totalorder %s136, %s138
      %p142 = scmp.eq.s32.totalorder %s25, 0
      %p143 = por %p141, %p142
      %p144 = scmp.ne.s32.totalorder %s136, %s138
      %p145 = scmp.eq.s32.totalorder %s30, 1
      %p146 = por %p144, %p145
      %p147 = scmp.ne.s32.totalorder %s138, %s139
      %p148 = scmp.eq.s32.totalorder %s30, 0
      %p149 = por %p147, %p148
      %p150 = scmp.ne.s32.totalorder %s138, %s139
      %p151 = scmp.eq.s32.totalorder %s31, 1
      %p152 = por %p150, %p151
      %p154 = scmp.ne.s32.totalorder %s139, %s153
      %p155 = scmp.eq.s32.totalorder %s31, 0
      %p156 = por %p154, %p155
      %s158 = sadd.s32 %s157, 1
      %p161 = scmp.eq.s32.totalorder %s25, 1
      %p162 = scmp.ne.s32.totalorder %s157, %s159
      %p163 = scmp.eq.s32.totalorder %s25, 0
      %p164 = por %p162, %p163
      %p165 = scmp.ne.s32.totalorder %s157, %s159
      %p166 = scmp.eq.s32.totalorder %s30, 1
      %p167 = por %p165, %p166
      %p168 = scmp.ne.s32.totalorder %s159, %s160
      %p169 = scmp.eq.s32.totalorder %s30, 0
      %p170 = por %p168, %p169
      %p171 = scmp.ne.s32.totalorder %s159, %s160
      %p172 = scmp.eq.s32.totalorder %s31, 1
      %p173 = por %p171, %p172
      %p175 = scmp.ne.s32.totalorder %s160, %s174
      %p176 = scmp.eq.s32.totalorder %s31, 0
      %p177 = por %p175, %p176
      %s179 = sadd.s32 %s178, 1
      %p182 = scmp.eq.s32.totalorder %s25, 1
      %p183 = scmp.ne.s32.totalorder %s178, %s180
      %p184 = scmp.eq.s32.totalorder %s25, 0
      %p185 = por %p183, %p184
      %p186 = scmp.ne.s32.totalorder %s178, %s180
      %p187 = scmp.eq.s32.totalorder %s30, 1
      %p188 = por %p186, %p187
      %p189 = scmp.ne.s32.totalorder %s180, %s181
      %p190 = scmp.eq.s32.totalorder %s30, 0
      %p191 = por %p189, %p190
      %p192 = scmp.ne.s32.totalorder %s180, %s181
      %p193 = scmp.eq.s32.totalorder %s31, 1
      %p194 = por %p192, %p193
      %p196 = scmp.ne.s32.totalorder %s181, %s195
      %p197 = scmp.eq.s32.totalorder %s31, 0
      %p198 = por %p196, %p197
      %s199 = ssub.s32 %s32, %s44
      %s200 = ssub.s32 %s33, %s40
      %s201 = sor.u32 %s199, %s200
      %p202 = scmp.eq.s32.totalorder %s201, 0
      %s204 = sadd.s32 %s203, 1
      %s205 = scalar_select %p202, %s203, %s204
      %p208 = pneg %p202
      %p209 = scmp.eq.s32.totalorder %s25, 1
      %p210 = por %p208, %p209
      %p211 = scmp.ne.s32.totalorder %s203, %s206
      %p212 = scmp.eq.s32.totalorder %s25, 0
      %p213 = por %p211, %p212
      %p214 = scmp.ne.s32.totalorder %s203, %s206
      %p215 = scmp.eq.s32.totalorder %s30, 1
      %p216 = por %p214, %p215
      %p217 = scmp.ne.s32.totalorder %s206, %s207
      %p218 = scmp.eq.s32.totalorder %s30, 0
      %p219 = por %p217, %p218
      %p220 = scmp.ne.s32.totalorder %s206, %s207
      %p221 = scmp.eq.s32.totalorder %s31, 1
      %p222 = por %p220, %p221
      %p224 = scmp.ne.s32.totalorder %s207, %s223
      %p225 = scmp.eq.s32.totalorder %s31, 0
      %p226 = por %p224, %p225
      %s227 = ssub.s32 %s32, %s44
      %s228 = ssub.s32 %s33, %s40
      %s229 = sor.u32 %s227, %s228
      %p230 = scmp.eq.s32.totalorder %s229, 0
      %s232 = sadd.s32 %s231, 1
      %s233 = scalar_select %p230, %s231, %s232
      %p236 = pneg %p230
      %p237 = scmp.eq.s32.totalorder %s25, 1
      %p238 = por %p236, %p237
      %p239 = scmp.ne.s32.totalorder %s231, %s234
      %p240 = scmp.eq.s32.totalorder %s25, 0
      %p241 = por %p239, %p240
      %p242 = scmp.ne.s32.totalorder %s231, %s234
      %p243 = scmp.eq.s32.totalorder %s30, 1
      %p244 = por %p242, %p243
      %p245 = scmp.ne.s32.totalorder %s234, %s235
      %p246 = scmp.eq.s32.totalorder %s30, 0
      %p247 = por %p245, %p246
      %p248 = scmp.ne.s32.totalorder %s234, %s235
      %p249 = scmp.eq.s32.totalorder %s31, 1
      %p250 = por %p248, %p249
      %p252 = scmp.ne.s32.totalorder %s235, %s251
      %p253 = scmp.eq.s32.totalorder %s31, 0
      %p254 = por %p252, %p253
      %s255 = ssub.s32 %s32, %s44
      %s256 = ssub.s32 %s33, %s40
      %s257 = sor.u32 %s255, %s256
      %p258 = scmp.eq.s32.totalorder %s257, 0
      %s260 = sadd.s32 %s259, 1
      %s261 = scalar_select %p258, %s259, %s260
      %p264 = pneg %p258
      %p265 = scmp.eq.s32.totalorder %s25, 1
      %p266 = por %p264, %p265
      %p267 = scmp.ne.s32.totalorder %s259, %s262
      %p268 = scmp.eq.s32.totalorder %s25, 0
      %p269 = por %p267, %p268
      %p270 = scmp.ne.s32.totalorder %s259, %s262
      %p271 = scmp.eq.s32.totalorder %s30, 1
      %p272 = por %p270, %p271
      %p273 = scmp.ne.s32.totalorder %s262, %s263
      %p274 = scmp.eq.s32.totalorder %s30, 0
      %p275 = por %p273, %p274
      %p276 = scmp.ne.s32.totalorder %s262, %s263
      %p277 = scmp.eq.s32.totalorder %s31, 1
      %p278 = por %p276, %p277
      %p280 = scmp.ne.s32.totalorder %s263, %s279
      %p281 = scmp.eq.s32.totalorder %s31, 0
      %p282 = por %p280, %p281
      %p283 = scmp.le.s32.totalorder 1, %s25
      %p284 = scmp.lt.s32.totalorder %s25, 3
      %p285 = pnand %p283, %p284
      %p286 = pneg %p285
      // Predicated region
      $region9: #{tpu_custom_call.1} parent=5 // pred_check
        _
      $region10: #{tpu_custom_call.1} parent=5 // pred_check_branch
        %288 = sbr.rel (%p285) target = $region12
      $region11: #{tpu_custom_call.1} parent=5 // pred_region
        %s289 = ssub.s32 %s25, 1
        // Predicated region
        $region13: #{tpu_custom_call.1} parent=11 // pred_check
          %p290 = pneg %p86
        $region14: #{tpu_custom_call.1} parent=11 // pred_check_branch
          %292 = sbr.rel (%p290) target = $region16
        $region15: #{tpu_custom_call.1} parent=11 // pred_region
          _
        $region16: #{tpu_custom_call.1} parent=11 // pred_fallthru
          _
        // Predicated region
        $region17: #{tpu_custom_call.1} parent=11 // pred_check
          %p293 = pneg %p107
        $region18: #{tpu_custom_call.1} parent=11 // pred_check_branch
          %295 = sbr.rel (%p293) target = $region20
        $region19: #{tpu_custom_call.1} parent=11 // pred_region
          _
        $region20: #{tpu_custom_call.1} parent=11 // pred_fallthru
          _
        // Predicated region
        $region21: #{tpu_custom_call.1} parent=11 // pred_check
          %p296 = pneg %p128
        $region22: #{tpu_custom_call.1} parent=11 // pred_check_branch
          %298 = sbr.rel (%p296) target = $region24
        $region23: #{tpu_custom_call.1} parent=11 // pred_region
          _
        $region24: #{tpu_custom_call.1} parent=11 // pred_fallthru
          _
        // Predicated region
        $region25: #{tpu_custom_call.1} parent=11 // pred_check
          %p299 = pneg %p149
        $region26: #{tpu_custom_call.1} parent=11 // pred_check_branch
          %301 = sbr.rel (%p299) target = $region28
        $region27: #{tpu_custom_call.1} parent=11 // pred_region
          _
        $region28: #{tpu_custom_call.1} parent=11 // pred_fallthru
          _
        // Predicated region
        $region29: #{tpu_custom_call.1} parent=11 // pred_check
          %p302 = pneg %p170
        $region30: #{tpu_custom_call.1} parent=11 // pred_check_branch
          %304 = sbr.rel (%p302) target = $region32
        $region31: #{tpu_custom_call.1} parent=11 // pred_region
          _
        $region32: #{tpu_custom_call.1} parent=11 // pred_fallthru
          _
        // Predicated region
        $region33: #{tpu_custom_call.1} parent=11 // pred_check
          %p305 = pneg %p191
        $region34: #{tpu_custom_call.1} parent=11 // pred_check_branch
          %307 = sbr.rel (%p305) target = $region36
        $region35: #{tpu_custom_call.1} parent=11 // pred_region
          _
        $region36: #{tpu_custom_call.1} parent=11 // pred_fallthru
          _
      $region12: #{tpu_custom_call.1} parent=5 // pred_fallthru
        _
      %p308 = scmp.lt.s32.totalorder %s25, 2
      // Predicated region
      $region37: #{tpu_custom_call.1} parent=5 // pred_check
        %p309 = pneg %p308
      $region38: #{tpu_custom_call.1} parent=5 // pred_check_branch
        %311 = sbr.rel (%p309) target = $region40
      $region39: #{tpu_custom_call.1} parent=5 // pred_region
        // Predicated region
        $region41: #{tpu_custom_call.1} parent=39 // pred_check
          %p312 = pneg %p59
        $region42: #{tpu_custom_call.1} parent=39 // pred_check_branch
          %314 = sbr.rel (%p312) target = $region44
        $region43: #{tpu_custom_call.1} parent=39 // pred_region
          %s315 = sand.u32 %s49, 1
          %s316 = scalar_lea.sflag [#allocation3], %s315
          %s317 = sand.u32 %s49, 1
          %s318 = smul.addr %s317, 32
          %s319 = scalar_lea.vmem [#allocation2], %s318
          %s320 = smul.u32 2, %s33
          %322 = vsyncadd %s316, 0
          %s323 = smul.addr %s32, 4
          %s324 = sadd.s32 %s320, %s323
          %s325 = smul.addr %s324, 8
          %s326 = scalar_lea.hbm %s0, %s325
          %s327 = sshll.u32 %s326, 4
          %s328 = int_to_ptr.hbm [resolvable:$true] %s327
          %s329 = sshll.u32 %s319, 4
          %s330 = int_to_ptr.vmem [resolvable:$true] %s329
          %335 = dma.hbm_to_vmem [thread:$0]  %s328, 512, %s330, %s316, 256, 256, 16
        $region44: #{tpu_custom_call.1} parent=39 // pred_fallthru
          _
      $region40: #{tpu_custom_call.1} parent=5 // pred_fallthru
        _
      %p336 = scmp.le.s32.totalorder 1, %s25
      %p337 = scmp.lt.s32.totalorder %s25, 3
      %p338 = pnand %p336, %p337
      %p339 = pneg %p338
      // Predicated region
      $region45: #{tpu_custom_call.1} parent=5 // pred_check
        _
      $region46: #{tpu_custom_call.1} parent=5 // pred_check_branch
        %341 = sbr.rel (%p338) target = $region48
      $region47: #{tpu_custom_call.1} parent=5 // pred_region
        %s342 = ssub.s32 %s25, 1
        %s343 = sand.u32 %s52, 1
        %s344 = scalar_lea.sflag [#allocation3], %s343
        %s345 = sand.u32 %s52, 1
        %s346 = smul.addr %s345, 32
        %s347 = scalar_lea.vmem [#allocation2], %s346
        // Predicated region
        $region49: #{tpu_custom_call.1} parent=47 // pred_check
          %p348 = pneg %p65
        $region50: #{tpu_custom_call.1} parent=47 // pred_check_branch
          %350 = sbr.rel (%p348) target = $region52
        $region51: #{tpu_custom_call.1} parent=47 // pred_region
          %352 = dma.done %s344, 512
        $region52: #{tpu_custom_call.1} parent=47 // pred_fallthru
          _
        %s353 = sand.u32 %s52, 1
        %s354 = scalar_lea.sflag [#allocation3], %s353
        %s355 = sand.u32 %s52, 1
        %s356 = smul.addr %s355, 32
        %s357 = scalar_lea.vmem [#allocation2], %s356
        %p358 = pneg %p65
        %p359 = pneg %p62
        %p360 = pneg %p86
        %p361 = pneg %p83
        %p362 = pneg %p107
        %p363 = pneg %p104
        %p364 = pneg %p128
        %p365 = pneg %p125
        %p366 = pneg %p149
        %p367 = pneg %p146
        %p368 = pneg %p170
        %p369 = pneg %p167
        %p370 = pneg %p191
        %p371 = pneg %p188
        %p372 = pneg %p219
        %p373 = pneg %p216
        %s374 = sand.u32 %s206, 1
        %s375 = scalar_lea.sflag [#allocation4], %s374
        %s376 = sand.u32 %s206, 1
        %s377 = smul.addr %s376, 2
        %s378 = scalar_lea.vmem [#allocation5], %s377
        %p379 = pneg %p247
        %p380 = pneg %p244
        %s381 = smul.u32 32, %s35
        %p382 = scmp.lt.s32.totalorder %s34, 1
        %s383 = scalar_select %p382, %s34, 1
        %p384 = scmp.lt.s32.totalorder %s381, 31
        %s385 = scalar_select %p384, %s381, 31
        %s386 = smul.addr %s383, 32
        %s387 = sadd.s32 %s385, %s386
        %s388 = smul.addr %s387, 4
        %s389 = scalar_lea.vmem %s8, %s388
        %p390 = pneg %p275
        %p391 = pneg %p272
        %s392 = sand.u32 %s262, 1
        %s393 = scalar_lea.sflag [#allocation7], %s392
        %s394 = sand.u32 %s262, 1
        %s395 = smul.addr %s394, 16
        %s396 = scalar_lea.vmem [#allocation6], %s395
        %s397 = smul.u32 2, %s35
        %s398 = smul.u32 2, %s35
        %s399 = smul.u32 32, %s35
        %p400 = scmp.lt.s32.totalorder %s34, 1
        %s401 = scalar_select %p400, %s34, 1
        %p402 = scmp.lt.s32.totalorder %s399, 31
        %s403 = scalar_select %p402, %s399, 31
        %s404 = smul.addr %s401, 32
        %s405 = sadd.s32 %s403, %s404
        %s406 = smul.addr %s405, 4
        %s407 = scalar_lea.vmem %s8, %s406
        %s408 = smul.u32 32, %s35
        %s409 = smul.u32 2, %s35
        %v411 = vld [vmem:[%s347] sm:$0xff]
        %v412 = vld [vmem:[%s347 + $0x8] sm:$0xff]
        %v413 = vld [vmem:[%s347 + $0x10] sm:$0xff]
        %v414 = vld [vmem:[%s347 + $0x18] sm:$0xff]
        %v415 = vpack.c.bf16 %v413, %v411
        %v416 = vpack.c.bf16 %v414, %v412
        %v417 = vld [vmem:[%s1] sm:$0x1]
        %v418 = vld [vmem:[%s2] sm:$0x3]
        %420 = vset.pattern.permute.xlu0 0
        %421 = vperm.xlu0 %420, %v418
        %v422 = vpop.permute.xlu0 %421
        %vm424 = vcmask 130048
        %v426 = vsel %vm424, %v417, 0
        %428 = vmatpush.bf16.msra.mxu0 0
        %429 = vmatpush.bf16.msra.mxu0 0
        %430 = vmatpush.bf16.msra.mxu0 0
        %431 = vmatpush.bf16.msra.mxu0 0
        %432 = vmatpush.bf16.msra.mxu0 0
        %433 = vmatpush.bf16.msra.mxu0 0
        %434 = vmatpush.bf16.msra.mxu0 0
        %435 = vmatpush.bf16.msra.mxu0 %v415
        %436 = vmatmul.bf16.gmra.mxu0 %v426
        %v437 = vpop.f32.mrf.mxu0
        %v438 = vadd.f32 %v422, %v437
        %v439 = vpop.f32.mrf.mxu0
        %440 = vdwg.mxu0
        %441 = vmatpush.bf16.msra.mxu0 0
        %442 = vmatpush.bf16.msra.mxu0 0
        %443 = vmatpush.bf16.msra.mxu0 0
        %444 = vmatpush.bf16.msra.mxu0 0
        %445 = vmatpush.bf16.msra.mxu0 0
        %446 = vmatpush.bf16.msra.mxu0 0
        %447 = vmatpush.bf16.msra.mxu0 0
        %448 = vmatpush.bf16.msra.mxu0 %v416
        %449 = vmatmul.bf16.gmra.mxu0 %v426
        %v450 = vpop.f32.mrf.mxu0
        %v451 = vadd.f32 %v422, %v450
        %v452 = vpop.f32.mrf.mxu0
        %453 = vdwg.mxu0
        %v454 = vld [vmem:[%s3] sm:$0x1]
        %v455 = vld [vmem:[%s4] sm:$0x3]
        %457 = vset.pattern.permute.xlu0 0
        %458 = vperm.xlu0 %457, %v455
        %v459 = vpop.permute.xlu0 %458
        %v462 = vsel %vm424, %v454, 0
        %464 = vmatpush.bf16.msra.mxu0 0
        %465 = vmatpush.bf16.msra.mxu0 0
        %466 = vmatpush.bf16.msra.mxu0 0
        %467 = vmatpush.bf16.msra.mxu0 0
        %468 = vmatpush.bf16.msra.mxu0 0
        %469 = vmatpush.bf16.msra.mxu0 0
        %470 = vmatpush.bf16.msra.mxu0 0
        %471 = vmatpush.bf16.msra.mxu0 %v415
        %472 = vmatmul.bf16.gmra.mxu0 %v462
        %v473 = vpop.f32.mrf.mxu0
        %v474 = vadd.f32 %v459, %v473
        %v475 = vpop.f32.mrf.mxu0
        %476 = vdwg.mxu0
        %477 = vmatpush.bf16.msra.mxu0 0
        %478 = vmatpush.bf16.msra.mxu0 0
        %479 = vmatpush.bf16.msra.mxu0 0
        %480 = vmatpush.bf16.msra.mxu0 0
        %481 = vmatpush.bf16.msra.mxu0 0
        %482 = vmatpush.bf16.msra.mxu0 0
        %483 = vmatpush.bf16.msra.mxu0 0
        %484 = vmatpush.bf16.msra.mxu0 %v416
        %485 = vmatmul.bf16.gmra.mxu0 %v462
        %v486 = vpop.f32.mrf.mxu0
        %v487 = vadd.f32 %v459, %v486
        %v488 = vpop.f32.mrf.mxu0
        %489 = vdwg.mxu0
        %v490 = vld [vmem:[%s5] sm:$0xf]
        %v491 = vld [vmem:[%s5 + $0x4] sm:$0xf]
        %v492 = vld [vmem:[%s6] sm:$0xff]
        %v493 = vld [vmem:[%s6 + $0x8] sm:$0xff]
        %495 = vset.pattern.permute.xlu0 0
        %496 = vperm.xlu0 %495, %v492
        %v497 = vpop.permute.xlu0 %496
        %500 = vset.pattern.permute.xlu0 0
        %501 = vperm.xlu0 %500, %v493
        %v502 = vpop.permute.xlu0 %501
        %v506 = vunpack.c.l.b16 %v490
        %v507 = vunpack.c.l.b16 %v491
        %v508 = vpack.c.b16 %v507, %v506
        %v510 = vsel %vm424, %v508, 0
        %512 = vmatpush.bf16.msra.mxu0 0
        %513 = vmatpush.bf16.msra.mxu0 0
        %514 = vmatpush.bf16.msra.mxu0 0
        %515 = vmatpush.bf16.msra.mxu0 0
        %516 = vmatpush.bf16.msra.mxu0 0
        %517 = vmatpush.bf16.msra.mxu0 0
        %518 = vmatpush.bf16.msra.mxu0 0
        %519 = vmatpush.bf16.msra.mxu0 %v415
        %520 = vmatmul.bf16.gmra.mxu0 %v510
        %v521 = vpop.f32.mrf.mxu0
        %v522 = vadd.f32 %v497, %v521
        %v523 = vpop.f32.mrf.mxu0
        %v524 = vadd.f32 %v502, %v523
        %525 = vdwg.mxu0
        %526 = vmatpush.bf16.msra.mxu0 0
        %527 = vmatpush.bf16.msra.mxu0 0
        %528 = vmatpush.bf16.msra.mxu0 0
        %529 = vmatpush.bf16.msra.mxu0 0
        %530 = vmatpush.bf16.msra.mxu0 0
        %531 = vmatpush.bf16.msra.mxu0 0
        %532 = vmatpush.bf16.msra.mxu0 0
        %533 = vmatpush.bf16.msra.mxu0 %v416
        %534 = vmatmul.bf16.gmra.mxu0 %v510
        %v535 = vpop.f32.mrf.mxu0
        %v536 = vadd.f32 %v497, %v535
        %v537 = vpop.f32.mrf.mxu0
        %v538 = vadd.f32 %v502, %v537
        %539 = vdwg.mxu0
        %v540 = vpack.c.bf16 %v451, %v438
        %v542 = vrot.slane %v540, 3
        %vm543 = vcmask 1040384
        %v546 = vsel %vm543, %v540, %v542
        %548 = vst [vmem:[%s378] sm:$0x3] %v546
        %549 = vxpose.xlu0.b32.start [1/16] %v474, 128
        %550 = vxpose.xlu0.b32.cont [2/16] 0.0, 128
        %551 = vxpose.xlu0.b32.cont [3/16] 0.0, 128
        %552 = vxpose.xlu0.b32.cont [4/16] 0.0, 128
        %553 = vxpose.xlu0.b32.cont [5/16] 0.0, 128
        %554 = vxpose.xlu0.b32.cont [6/16] 0.0, 128
        %555 = vxpose.xlu0.b32.cont [7/16] 0.0, 128
        %556 = vxpose.xlu0.b32.cont [8/16] 0.0, 128
        %557 = vxpose.xlu0.b32.cont [9/16] 0.0, 128
        %558 = vxpose.xlu0.b32.cont [10/16] 0.0, 128
        %559 = vxpose.xlu0.b32.cont [11/16] 0.0, 128
        %560 = vxpose.xlu0.b32.cont [12/16] 0.0, 128
        %561 = vxpose.xlu0.b32.cont [13/16] 0.0, 128
        %562 = vxpose.xlu0.b32.cont [14/16] 0.0, 128
        %563 = vxpose.xlu0.b32.cont [15/16] 0.0, 128
        %564 = vxpose.xlu0.b32.end [16/16] 0.0, 128
        %v565 = vpop.trf.xlu0
        %v566 = vpop.trf.xlu0
        %v567 = vpop.trf.xlu0
        %v568 = vpop.trf.xlu0
        %v569 = vpop.trf.xlu0
        %v570 = vpop.trf.xlu0
        %v571 = vpop.trf.xlu0
        %v572 = vpop.trf.xlu0
        %v573 = vpop.trf.xlu0
        %v574 = vpop.trf.xlu0
        %v575 = vpop.trf.xlu0
        %v576 = vpop.trf.xlu0
        %v577 = vpop.trf.xlu0
        %v578 = vpop.trf.xlu0
        %v579 = vpop.trf.xlu0
        %v580 = vpop.trf.xlu0
        %581 = vxpose.xlu0.b32.start [1/16] %v487, 128
        %582 = vxpose.xlu0.b32.cont [2/16] 0.0, 128
        %583 = vxpose.xlu0.b32.cont [3/16] 0.0, 128
        %584 = vxpose.xlu0.b32.cont [4/16] 0.0, 128
        %585 = vxpose.xlu0.b32.cont [5/16] 0.0, 128
        %586 = vxpose.xlu0.b32.cont [6/16] 0.0, 128
        %587 = vxpose.xlu0.b32.cont [7/16] 0.0, 128
        %588 = vxpose.xlu0.b32.cont [8/16] 0.0, 128
        %589 = vxpose.xlu0.b32.cont [9/16] 0.0, 128
        %590 = vxpose.xlu0.b32.cont [10/16] 0.0, 128
        %591 = vxpose.xlu0.b32.cont [11/16] 0.0, 128
        %592 = vxpose.xlu0.b32.cont [12/16] 0.0, 128
        %593 = vxpose.xlu0.b32.cont [13/16] 0.0, 128
        %594 = vxpose.xlu0.b32.cont [14/16] 0.0, 128
        %595 = vxpose.xlu0.b32.cont [15/16] 0.0, 128
        %596 = vxpose.xlu0.b32.end [16/16] 0.0, 128
        %v597 = vpop.trf.xlu0
        %v598 = vpop.trf.xlu0
        %v599 = vpop.trf.xlu0
        %v600 = vpop.trf.xlu0
        %v601 = vpop.trf.xlu0
        %v602 = vpop.trf.xlu0
        %v603 = vpop.trf.xlu0
        %v604 = vpop.trf.xlu0
        %v605 = vpop.trf.xlu0
        %v606 = vpop.trf.xlu0
        %v607 = vpop.trf.xlu0
        %v608 = vpop.trf.xlu0
        %v609 = vpop.trf.xlu0
        %v610 = vpop.trf.xlu0
        %v611 = vpop.trf.xlu0
        %v612 = vpop.trf.xlu0
        %v613 = vpack.c.bf16 %v565, %v565
        %v614 = vpack.c.bf16 %v566, %v566
        %v615 = vpack.c.bf16 %v567, %v567
        %v616 = vpack.c.bf16 %v568, %v568
        %v617 = vpack.c.bf16 %v569, %v569
        %v618 = vpack.c.bf16 %v570, %v570
        %v619 = vpack.c.bf16 %v571, %v571
        %v620 = vpack.c.bf16 %v572, %v572
        %v621 = vpack.c.bf16 %v573, %v573
        %v622 = vpack.c.bf16 %v574, %v574
        %v623 = vpack.c.bf16 %v575, %v575
        %v624 = vpack.c.bf16 %v576, %v576
        %v625 = vpack.c.bf16 %v577, %v577
        %v626 = vpack.c.bf16 %v578, %v578
        %v627 = vpack.c.bf16 %v579, %v579
        %v628 = vpack.c.bf16 %v580, %v580
        %v629 = vpack.c.bf16 %v597, %v597
        %v630 = vpack.c.bf16 %v598, %v598
        %v631 = vpack.c.bf16 %v599, %v599
        %v632 = vpack.c.bf16 %v600, %v600
        %v633 = vpack.c.bf16 %v601, %v601
        %v634 = vpack.c.bf16 %v602, %v602
        %v635 = vpack.c.bf16 %v603, %v603
        %v636 = vpack.c.bf16 %v604, %v604
        %v637 = vpack.c.bf16 %v605, %v605
        %v638 = vpack.c.bf16 %v606, %v606
        %v639 = vpack.c.bf16 %v607, %v607
        %v640 = vpack.c.bf16 %v608, %v608
        %v641 = vpack.c.bf16 %v609, %v609
        %v642 = vpack.c.bf16 %v610, %v610
        %v643 = vpack.c.bf16 %v611, %v611
        %v644 = vpack.c.bf16 %v612, %v612
        %vm645 = vcmask 11264
        %646 = vst.msk [vmem:[%s407] sm:$0xf] %vm645, %v613
        %647 = vst.msk [vmem:[%s407 + $0x4] sm:$0xf] %vm645, %v614
        %648 = vst.msk [vmem:[%s407 + $0x8] sm:$0xf] %vm645, %v615
        %649 = vst.msk [vmem:[%s407 + $0xc] sm:$0xf] %vm645, %v616
        %650 = vst.msk [vmem:[%s407 + $0x10] sm:$0xf] %vm645, %v617
        %651 = vst.msk [vmem:[%s407 + $0x14] sm:$0xf] %vm645, %v618
        %652 = vst.msk [vmem:[%s407 + $0x18] sm:$0xf] %vm645, %v619
        %653 = vst.msk [vmem:[%s407 + $0x1c] sm:$0xf] %vm645, %v620
        %654 = vst.msk [vmem:[%s407 + $0x20] sm:$0xf] %vm645, %v621
        %655 = vst.msk [vmem:[%s407 + $0x24] sm:$0xf] %vm645, %v622
        %656 = vst.msk [vmem:[%s407 + $0x28] sm:$0xf] %vm645, %v623
        %657 = vst.msk [vmem:[%s407 + $0x2c] sm:$0xf] %vm645, %v624
        %658 = vst.msk [vmem:[%s407 + $0x30] sm:$0xf] %vm645, %v625
        %659 = vst.msk [vmem:[%s407 + $0x34] sm:$0xf] %vm645, %v626
        %660 = vst.msk [vmem:[%s407 + $0x38] sm:$0xf] %vm645, %v627
        %661 = vst.msk [vmem:[%s407 + $0x3c] sm:$0xf] %vm645, %v628
        %662 = vst.msk [vmem:[%s407 + $0x40] sm:$0xf] %vm645, %v629
        %663 = vst.msk [vmem:[%s407 + $0x44] sm:$0xf] %vm645, %v630
        %664 = vst.msk [vmem:[%s407 + $0x48] sm:$0xf] %vm645, %v631
        %665 = vst.msk [vmem:[%s407 + $0x4c] sm:$0xf] %vm645, %v632
        %666 = vst.msk [vmem:[%s407 + $0x50] sm:$0xf] %vm645, %v633
        %667 = vst.msk [vmem:[%s407 + $0x54] sm:$0xf] %vm645, %v634
        %668 = vst.msk [vmem:[%s407 + $0x58] sm:$0xf] %vm645, %v635
        %669 = vst.msk [vmem:[%s407 + $0x5c] sm:$0xf] %vm645, %v636
        %670 = vst.msk [vmem:[%s407 + $0x60] sm:$0xf] %vm645, %v637
        %671 = vst.msk [vmem:[%s407 + $0x64] sm:$0xf] %vm645, %v638
        %672 = vst.msk [vmem:[%s407 + $0x68] sm:$0xf] %vm645, %v639
        %673 = vst.msk [vmem:[%s407 + $0x6c] sm:$0xf] %vm645, %v640
        %674 = vst.msk [vmem:[%s407 + $0x70] sm:$0xf] %vm645, %v641
        %675 = vst.msk [vmem:[%s407 + $0x74] sm:$0xf] %vm645, %v642
        %676 = vst.msk [vmem:[%s407 + $0x78] sm:$0xf] %vm645, %v643
        %677 = vst.msk [vmem:[%s407 + $0x7c] sm:$0xf] %vm645, %v644
        %v678 = vpack.c.bf16 %v536, %v522
        %v679 = vpack.c.bf16 %v538, %v524
        %680 = vst [vmem:[%s396] sm:$0xff] %v678
        %681 = vst [vmem:[%s396 + $0x8] sm:$0xff] %v679
        %s682 = sand.u32 %s206, 1
        %s683 = scalar_lea.sflag [#allocation4], %s682
        %s684 = sand.u32 %s206, 1
        %s685 = smul.addr %s684, 2
        %s686 = scalar_lea.vmem [#allocation5], %s685
        %s687 = smul.u32 32, %s35
        %p688 = scmp.lt.s32.totalorder %s34, 1
        %s689 = scalar_select %p688, %s34, 1
        %p690 = scmp.lt.s32.totalorder %s687, 31
        %s691 = scalar_select %p690, %s687, 31
        %s692 = smul.addr %s689, 32
        %s693 = sadd.s32 %s691, %s692
        %s694 = smul.addr %s693, 4
        %s695 = scalar_lea.vmem %s8, %s694
        %s696 = sand.u32 %s262, 1
        %s697 = scalar_lea.sflag [#allocation7], %s696
        %s698 = sand.u32 %s262, 1
        %s699 = smul.addr %s698, 16
        %s700 = scalar_lea.vmem [#allocation6], %s699
        // Predicated region
        $region53: #{tpu_custom_call.1} parent=47 // pred_check
          %p701 = pneg %p216
        $region54: #{tpu_custom_call.1} parent=47 // pred_check_branch
          %703 = sbr.rel (%p701) target = $region56
        $region55: #{tpu_custom_call.1} parent=47 // pred_region
          %s704 = smul.u32 2, %s35
          %706 = vsyncadd %s683, 0
          %s707 = smul.addr %s34, 2
          %s708 = sadd.s32 %s704, %s707
          %s709 = scalar_lea.hbm %s7, %s708
          %s711 = sshll.u32 %s686, 4
          %s712 = int_to_ptr.vmem [resolvable:$true] %s711
          %s713 = sshll.u32 %s709, 4
          %s714 = int_to_ptr.hbm [resolvable:$true] %s713
          %716 = dma.vmem_to_hbm [thread:$0]  %s712, 32, %s714, %s683
        $region56: #{tpu_custom_call.1} parent=47 // pred_fallthru
          _
        // Predicated region
        $region57: #{tpu_custom_call.1} parent=47 // pred_check
          %p717 = pneg %p244
        $region58: #{tpu_custom_call.1} parent=47 // pred_check_branch
          %719 = sbr.rel (%p717) target = $region60
        $region59: #{tpu_custom_call.1} parent=47 // pred_region
          %s720 = smul.u32 32, %s35
        $region60: #{tpu_custom_call.1} parent=47 // pred_fallthru
          _
        // Predicated region
        $region61: #{tpu_custom_call.1} parent=47 // pred_check
          %p721 = pneg %p272
        $region62: #{tpu_custom_call.1} parent=47 // pred_check_branch
          %723 = sbr.rel (%p721) target = $region64
        $region63: #{tpu_custom_call.1} parent=47 // pred_region
          %s724 = smul.u32 2, %s35
          %726 = vsyncadd %s697, 0
          %s727 = smul.addr %s34, 4
          %s728 = sadd.s32 %s724, %s727
          %s729 = smul.addr %s728, 4
          %s730 = scalar_lea.hbm %s9, %s729
          %s731 = sshll.u32 %s700, 4
          %s732 = int_to_ptr.vmem [resolvable:$true] %s731
          %s733 = sshll.u32 %s730, 4
          %s734 = int_to_ptr.hbm [resolvable:$true] %s733
          %739 = dma.vmem_to_hbm [thread:$0]  %s732, 256, %s734, %s697, 128, 128, 8
        $region64: #{tpu_custom_call.1} parent=47 // pred_fallthru
          _
      $region48: #{tpu_custom_call.1} parent=5 // pred_fallthru
        _
      %p740 = scmp.le.s32.totalorder 2, %s25
      // Predicated region
      $region65: #{tpu_custom_call.1} parent=5 // pred_check
        %p741 = pneg %p740
      $region66: #{tpu_custom_call.1} parent=5 // pred_check_branch
        %743 = sbr.rel (%p741) target = $region68
      $region67: #{tpu_custom_call.1} parent=5 // pred_region
        %s744 = ssub.s32 %s25, 2
        // Predicated region
        $region69: #{tpu_custom_call.1} parent=67 // pred_check
          %p745 = pneg %p222
        $region70: #{tpu_custom_call.1} parent=67 // pred_check_branch
          %747 = sbr.rel (%p745) target = $region72
        $region71: #{tpu_custom_call.1} parent=67 // pred_region
          %s748 = sand.u32 %s207, 1
          %s749 = scalar_lea.sflag [#allocation4], %s748
          %s750 = sand.u32 %s207, 1
          %s751 = smul.addr %s750, 2
          %s752 = scalar_lea.vmem [#allocation5], %s751
          %754 = dma.done %s749, 32
        $region72: #{tpu_custom_call.1} parent=67 // pred_fallthru
          _
        // Predicated region
        $region73: #{tpu_custom_call.1} parent=67 // pred_check
          %p755 = pneg %p250
        $region74: #{tpu_custom_call.1} parent=67 // pred_check_branch
          %757 = sbr.rel (%p755) target = $region76
        $region75: #{tpu_custom_call.1} parent=67 // pred_region
          %s758 = smul.u32 32, %s37
          %p759 = scmp.lt.s32.totalorder %s36, 1
          %s760 = scalar_select %p759, %s36, 1
          %p761 = scmp.lt.s32.totalorder %s758, 31
          %s762 = scalar_select %p761, %s758, 31
          %s763 = smul.addr %s760, 32
          %s764 = sadd.s32 %s762, %s763
          %s765 = smul.addr %s764, 4
          %s766 = scalar_lea.vmem %s8, %s765
        $region76: #{tpu_custom_call.1} parent=67 // pred_fallthru
          _
        // Predicated region
        $region77: #{tpu_custom_call.1} parent=67 // pred_check
          %p767 = pneg %p278
        $region78: #{tpu_custom_call.1} parent=67 // pred_check_branch
          %769 = sbr.rel (%p767) target = $region80
        $region79: #{tpu_custom_call.1} parent=67 // pred_region
          %s770 = sand.u32 %s263, 1
          %s771 = scalar_lea.sflag [#allocation7], %s770
          %s772 = sand.u32 %s263, 1
          %s773 = smul.addr %s772, 16
          %s774 = scalar_lea.vmem [#allocation6], %s773
          %776 = dma.done %s771, 256
        $region80: #{tpu_custom_call.1} parent=67 // pred_fallthru
          _
      $region68: #{tpu_custom_call.1} parent=5 // pred_fallthru
        _
    $region6: #{tpu_custom_call.1} parent=1 // loop_footer
      %s29 = sadd.s32 1, %s25
    $region7: #{tpu_custom_call.1} parent=1 // loop_footer_branch
      %24 = sbr.rel target = $region3
    $region8: #{tpu_custom_call.1} parent=1 // loop_exit
      _
    %777 = vsyncpa [#allocation3], 1
    %s778 = scalar_lea.sflag [#allocation3], 1
    %779 = vsyncpa %s778, 1
    %780 = vsyncpa [#allocation4], 1
    %s781 = scalar_lea.sflag [#allocation4], 1
    %782 = vsyncpa %s781, 1
    %783 = vsyncpa [#allocation7], 1
    %s784 = scalar_lea.sflag [#allocation7], 1
    %785 = vsyncpa %s784, 1

</llo_original>
